<compile_context>
chip_gen: v7x
topology: tpu7x:2x2x1
jax: 0.10.0
libtpu: 0.0.40
codegen_flags: <defaults>
</compile_context>

<pallas_src>
import functools
import numpy as np
import jax
import jax.numpy as jnp
from jax.experimental import pallas as pl
from jax.experimental.pallas import tpu as pltpu


def _rmsnorm_kernel(x_ref, g_ref, o_ref, *, eps):
    # x_ref: (1, C, TL) tile; g_ref: (1, C, 1) gain (already * sqrt(C)); o_ref: (1, C, TL)
    #
    # Partial tail blocks: the grid uses cdiv(L, TL), so the last lane tile may
    # overrun the array.  OOB lanes hold unspecified data; this is safe ONLY
    # because the reduction below is over the channel (sublane) axis, which is
    # always fully in-bounds -- every lane's computation is independent and
    # stores to OOB lanes are masked by Pallas.  Do not change the reduction
    # axis without revisiting this.
    x = x_ref[...].astype(jnp.float32)
    ssq = jnp.sum(x * x, axis=1, keepdims=True)                 # (1, 1, TL)
    # 1 / max(sqrt(ssq), eps)  ==  rsqrt(max(ssq, eps^2))  -> EUP, no f32 divide.
    # (eps^2 = 1e-24 is still a normal f32; rsqrt differs from sqrt+div by ULPs.)
    inv = jax.lax.rsqrt(jnp.maximum(ssq, eps * eps))            # (1, 1, TL)
    o_ref[...] = (x * inv * g_ref[...].astype(jnp.float32)).astype(o_ref.dtype)


def _vmem_capacity_bytes():
    try:
        return int(pltpu.get_tpu_info().vmem_capacity_bytes)
    except Exception:
        return 64 * 1024 * 1024  # conservative fallback: assume smallest (v7x-class) VMEM


def _round_up(v, m):
    return -(-v // m) * m


def rmsnorm(x, g, *, eps=1e-12):
    """Equivalent of RMSNorm.forward for x with ndim >= 2 (channel axis = 1)."""
    assert x.ndim >= 2, "RMSNorm kernel expects channel axis at dim 1 (ndim >= 2)"
    N, C = x.shape[0], x.shape[1]
    assert g.shape == (C,)

    # Contiguous reshape only -- no transposes, no extra HBM traffic.
    L = int(np.prod(x.shape[2:])) if x.ndim > 2 else 1
    x3 = x.reshape(N, C, L)

    # Fold sqrt(C) into the gain once (touches only the (C,) vector, not the tensor).
    g3 = (g.astype(jnp.float32) * (float(C) ** 0.5)).reshape(1, C, 1)

    itemsize = jnp.dtype(x.dtype).itemsize

    # Generation-aware VMEM budgeting.
    vmem_cap = _vmem_capacity_bytes()
    big_vmem = vmem_cap >= 128 * 1024 * 1024           # v5e / v6e (128 MiB physical)
    if big_vmem:
        vmem_limit = 96 * 1024 * 1024
        live_budget = 64 * 1024 * 1024
    else:                                               # v7x-class (64 MiB physical)
        vmem_limit = 32 * 1024 * 1024
        live_budget = 20 * 1024 * 1024

    # Live-VMEM model per lane column (one spatial position, all C channels):
    #   2x double-buffered input + 2x double-buffered output in the native dtype
    #   + ~3 f32 temporaries from the in-kernel upcast (x32, x32*x32/ssq, y).
    bytes_per_lane = C * (4 * itemsize + 3 * 4)
    tl_max = max(128, (live_budget // max(1, bytes_per_lane)) // 128 * 128)

    # No divisibility constraint on L: grid uses cdiv, Pallas masks the tail block.
    tl = min(tl_max, _round_up(L, 128))

    # On 2-TensorCore chips the "parallel" grid axes are sharded across cores;
    # make sure there are enough grid steps for both cores + pipeline overlap.
    if not big_vmem:
        min_steps = 8
        while tl > 128 and N * (-(-L // tl)) < min_steps:
            tl = max(128, _round_up(tl // 2, 128))

    grid = (N, pl.cdiv(L, tl))

    kernel = functools.partial(_rmsnorm_kernel, eps=float(eps))

    out3 = pl.pallas_call(
        kernel,
        out_shape=jax.ShapeDtypeStruct((N, C, L), x.dtype),
        grid_spec=pltpu.PrefetchScalarGridSpec(
            num_scalar_prefetch=0,
            grid=grid,
            in_specs=[
                pl.BlockSpec((1, C, tl), lambda n, j: (n, 0, j)),
                pl.BlockSpec((1, C, 1), lambda n, j: (0, 0, 0)),
            ],
            out_specs=pl.BlockSpec((1, C, tl), lambda n, j: (n, 0, j)),
        ),
        compiler_params=pltpu.CompilerParams(
            dimension_semantics=("parallel", "parallel"),
            vmem_limit_bytes=vmem_limit,
        ),
    )(x3, g3)

    return out3.reshape(x.shape)


def rmsnorm_reference(x, g):
    # Pure-JAX reference mirroring the PyTorch forward.
    C = x.shape[1]
    nrm = jnp.sqrt(jnp.sum(x.astype(jnp.float32) ** 2, axis=1, keepdims=True))
    nrm = jnp.maximum(nrm, 1e-12)
    g_b = g.reshape((1, C) + (1,) * (x.ndim - 2))
    return ((x / nrm) * g_b * (C ** 0.5)).astype(x.dtype)


if __name__ == "__main__":
    key = jax.random.PRNGKey(0)
    kx, kg, kx2 = jax.random.split(key, 3)

    # Primary test: the module's canonical small shape.
    N, C, H, W = 2, 4, 16, 16
    x = jax.random.normal(kx, (N, C, H, W), dtype=jnp.float32)
    g = jax.random.normal(kg, (C,), dtype=jnp.float32)   # nn.Parameter(torch.randn(dim))

    out = jax.block_until_ready(rmsnorm(x, g))
    ref = rmsnorm_reference(x, g)
    np.testing.assert_allclose(np.asarray(out), np.asarray(ref), rtol=1e-5, atol=1e-5)

    # Ragged-L test: H*W = 160 is not a multiple of 128 -> exercises the masked
    # partial tail block (no pad / slice passes in the wrapper).
    x2 = jax.random.normal(kx2, (N, C, 16, 10), dtype=jnp.float32)
    out2 = jax.block_until_ready(rmsnorm(x2, g))
    ref2 = rmsnorm_reference(x2, g)
    np.testing.assert_allclose(np.asarray(out2), np.asarray(ref2), rtol=1e-5, atol=1e-5)

    print("KERNEL_OK")
</pallas_src>

<mosaic_0001>
module attributes {stable_mosaic.version = 11 : i64} {
  func.func @_rmsnorm_kernel(%arg0: i32, %arg1: i32, %arg2: memref<1x4x128xf32, #tpu.memory_space<vmem>>, %arg3: memref<1x4x1xf32, #tpu.memory_space<vmem>>, %arg4: memref<1x4x128xf32, #tpu.memory_space<vmem>>) attributes {dimension_semantics = [#tpu.dimension_semantics<parallel>, #tpu.dimension_semantics<parallel>], iteration_bounds = array<i64: 2, 2>, scalar_prefetch = 0 : i64, scratch_operands = 0 : i64, tpu.core_type = #tpu.core_type<tc>, window_params = [{transform_indices = @transform_0, window_bounds = array<i64: 1, 4, 128>}, {pipeline_mode = #tpu.pipeline_mode<synchronous>, transform_indices = @transform_1, window_bounds = array<i64: 1, 4, 1>}, {transform_indices = @transform_2, window_bounds = array<i64: 1, 4, 128>}]} {
    %c0 = arith.constant 0 : index
    %c0_0 = arith.constant 0 : index
    %c0_1 = arith.constant 0 : index
    %0 = vector.load %arg2[%c0, %c0_0, %c0_1] : memref<1x4x128xf32, #tpu.memory_space<vmem>>, vector<1x4x128xf32>
    %1 = arith.mulf %0, %0 : vector<1x4x128xf32>
    %cst = arith.constant dense<0.000000e+00> : vector<1x128xf32>
    %2 = vector.multi_reduction <add>, %1, %cst [1] : vector<1x4x128xf32> to vector<1x128xf32>
    %3 = vector.shape_cast %2 : vector<1x128xf32> to vector<1x1x128xf32>
    %cst_2 = arith.constant 1.000000e-24 : f32
    %4 = vector.broadcast %cst_2 : f32 to vector<1x1x128xf32>
    %5 = arith.maximumf %3, %4 : vector<1x1x128xf32>
    %6 = math.rsqrt %5 : vector<1x1x128xf32>
    %7 = vector.broadcast %6 : vector<1x1x128xf32> to vector<1x4x128xf32>
    %8 = arith.mulf %0, %7 : vector<1x4x128xf32>
    %c0_3 = arith.constant 0 : index
    %c0_4 = arith.constant 0 : index
    %c0_5 = arith.constant 0 : index
    %9 = vector.load %arg3[%c0_3, %c0_4, %c0_5] : memref<1x4x1xf32, #tpu.memory_space<vmem>>, vector<1x4x1xf32>
    %10 = vector.broadcast %9 : vector<1x4x1xf32> to vector<1x4x128xf32>
    %11 = arith.mulf %8, %10 : vector<1x4x128xf32>
    %c0_6 = arith.constant 0 : index
    %c0_7 = arith.constant 0 : index
    %c0_8 = arith.constant 0 : index
    %12 = vector.load %arg4[%c0_6, %c0_7, %c0_8] : memref<1x4x128xf32, #tpu.memory_space<vmem>>, vector<1x4x128xf32>
    tpu.vector_store %arg4[%c0_6, %c0_7, %c0_8], %11 {strides = array<i32>} : memref<1x4x128xf32, #tpu.memory_space<vmem>>, vector<1x4x128xf32>,
    return
  }
  func.func @transform_0(%arg0: i32, %arg1: i32) -> (i32, i32, i32) {
    %c0_i32 = arith.constant 0 : i32
    %c0_i32_0 = arith.constant 0 : i32
    return %arg0, %c0_i32, %arg1 : i32, i32, i32
  }
  func.func @transform_1(%arg0: i32, %arg1: i32) -> (i32, i32, i32) {
    %c0_i32 = arith.constant 0 : i32
    %c0_i32_0 = arith.constant 0 : i32
    %c0_i32_1 = arith.constant 0 : i32
    %c0_i32_2 = arith.constant 0 : i32
    return %c0_i32, %c0_i32_0, %c0_i32_1 : i32, i32, i32
  }
  func.func @transform_2(%arg0: i32, %arg1: i32) -> (i32, i32, i32) {
    %c0_i32 = arith.constant 0 : i32
    %c0_i32_0 = arith.constant 0 : i32
    return %arg0, %c0_i32, %arg1 : i32, i32, i32
  }
}

</mosaic_0001>

<llo_original>
// kernel: tpu_custom_call.1
$region0: #{tpu_custom_call.1}
  #allocation0 [shape = 'u32[]', space=smem, size = 0x4, offset = 0x4, fixed_abs, tag = 'smem constant byte address 0x4 - core index']
  #allocation1 [shape = 'u32[144,128]{1,0:T(1,128)}', space=vmem, size = 0x12000, scoped, tag = 'internal scratch']
  %s0 = inlined_call_operand.hbm [shape: f32[2,4,256], index: 0, kind: input, shape index: {}]
  %s1 = inlined_call_operand.vmem [shape: f32[1,4,1], index: 1, kind: input, shape index: {}]
  %s2 = inlined_call_operand.hbm [shape: f32[2,4,256], index: 2, kind: output, shape index: {}]
  %s3 = sld [smem:[#allocation0]]
  $region45: #{tpu_custom_call.1} parent=0
    _
  %s5 = ssub.s32 1, %s3
  %s6 = scalar_select 0, %s5, %s3
  $region1: #{tpu_custom_call.1} parent=0
    #allocation2 [shape = 'u8[4096]{0}', space=vmem, size = 0x1000, scoped, tag = 'input window, operand 0']
    #allocation3 [shape = 's32[2]{0}', space=sflag, size = 0x8, scoped, tag = 'scoped memory for tpu_custom_call.1']
    #allocation4 [shape = 's32[2]{0}', space=sflag, size = 0x8, scoped, tag = 'scoped memory for tpu_custom_call.1']
    #allocation5 [shape = 'u8[4096]{0}', space=vmem, size = 0x1000, scoped, tag = 'output window, operand 0']
    %7 = vsyncpa [#allocation3], 0
    %s8 = scalar_lea.sflag [#allocation3], 1
    %9 = vsyncpa %s8, 0
    %10 = vsyncpa [#allocation4], 0
    %s11 = scalar_lea.sflag [#allocation4], 1
    %12 = vsyncpa %s11, 0
    loop: start=0, step=1, limit=6
    $region2: #{tpu_custom_call.1} parent=1 // loop_pre_header
      _
    $region3: #{tpu_custom_call.1} parent=1 // loop_header
      %s14 = sphi 0, %s18
      %p15 = scmp.ge.s32.totalorder %s14, 6
      %s21 = sphi 0, %s33
      %s22 = sphi 0, %s29
      %s23 = sphi 0, %s21
      %s24 = sphi 0, %s22
      %s25 = sphi 0, %s23
      %s26 = sphi 0, %s24
      %s38 = sphi 0, %s40
      %s41 = sphi 0, %s38
      %s42 = sphi 0, %s41
      %s58 = sphi 0, %s42
      %s62 = sphi 0, %s62
      %s64 = sphi 0, %s62
      %s65 = sphi 0, %s64
      %s79 = sphi 0, %s65
      %s87 = sphi 0, %s89
      %s90 = sphi 0, %s87
      %s91 = sphi 0, %s90
      %s107 = sphi 0, %s91
    $region4: #{tpu_custom_call.1} parent=1 // loop_header_branch
      %17 = sbr.rel (%p15) target = $region8
    $region5: #{tpu_custom_call.1} parent=1 // loop_body
      %s19 = ssub.s32 %s14, 1
      %s20 = ssub.s32 %s14, 2
      %s27 = sadd.s32 1, %s22
      %p28 = scmp.ge.s32.totalorder %s27, 2
      %s29 = scalar_select %p28, 0, %s27
      %s30 = sadd.s32 1, %s21
      %s31 = scalar_select %p28, %s30, %s21
      %p32 = scmp.ge.s32.totalorder %s31, 2
      %s33 = scalar_select %p32, 0, %s31
      %s34 = ssub.s32 %s21, %s33
      %s35 = ssub.s32 %s22, %s29
      %s36 = sor.u32 %s34, %s35
      %p37 = scmp.eq.s32.totalorder %s36, 0
      %s39 = sadd.s32 %s38, 1
      %s40 = scalar_select %p37, %s38, %s39
      %p43 = pneg %p37
      %p44 = scmp.eq.s32.totalorder %s14, 3
      %p45 = por %p43, %p44
      %p46 = scmp.ne.s32.totalorder %s38, %s41
      %p47 = scmp.eq.s32.totalorder %s14, 0
      %p48 = por %p46, %p47
      %p49 = scmp.ne.s32.totalorder %s38, %s41
      %p50 = scmp.eq.s32.totalorder %s19, 3
      %p51 = por %p49, %p50
      %p52 = scmp.ne.s32.totalorder %s41, %s42
      %p53 = scmp.eq.s32.totalorder %s19, 0
      %p54 = por %p52, %p53
      %p55 = scmp.ne.s32.totalorder %s41, %s42
      %p56 = scmp.eq.s32.totalorder %s20, 3
      %p57 = por %p55, %p56
      %p59 = scmp.ne.s32.totalorder %s42, %s58
      %p60 = scmp.eq.s32.totalorder %s20, 0
      %p61 = por %p59, %p60
      %s63 = sadd.s32 %s62, 1
      %p66 = scmp.eq.s32.totalorder %s14, 3
      %p67 = scmp.ne.s32.totalorder %s62, %s64
      %p68 = scmp.eq.s32.totalorder %s14, 0
      %p69 = por %p67, %p68
      %p70 = scmp.ne.s32.totalorder %s62, %s64
      %p71 = scmp.eq.s32.totalorder %s19, 3
      %p72 = por %p70, %p71
      %p73 = scmp.ne.s32.totalorder %s64, %s65
      %p74 = scmp.eq.s32.totalorder %s19, 0
      %p75 = por %p73, %p74
      %p76 = scmp.ne.s32.totalorder %s64, %s65
      %p77 = scmp.eq.s32.totalorder %s20, 3
      %p78 = por %p76, %p77
      %p80 = scmp.ne.s32.totalorder %s65, %s79
      %p81 = scmp.eq.s32.totalorder %s20, 0
      %p82 = por %p80, %p81
      %s83 = ssub.s32 %s21, %s33
      %s84 = ssub.s32 %s22, %s29
      %s85 = sor.u32 %s83, %s84
      %p86 = scmp.eq.s32.totalorder %s85, 0
      %s88 = sadd.s32 %s87, 1
      %s89 = scalar_select %p86, %s87, %s88
      %p92 = pneg %p86
      %p93 = scmp.eq.s32.totalorder %s14, 3
      %p94 = por %p92, %p93
      %p95 = scmp.ne.s32.totalorder %s87, %s90
      %p96 = scmp.eq.s32.totalorder %s14, 0
      %p97 = por %p95, %p96
      %p98 = scmp.ne.s32.totalorder %s87, %s90
      %p99 = scmp.eq.s32.totalorder %s19, 3
      %p100 = por %p98, %p99
      %p101 = scmp.ne.s32.totalorder %s90, %s91
      %p102 = scmp.eq.s32.totalorder %s19, 0
      %p103 = por %p101, %p102
      %p104 = scmp.ne.s32.totalorder %s90, %s91
      %p105 = scmp.eq.s32.totalorder %s20, 3
      %p106 = por %p104, %p105
      %p108 = scmp.ne.s32.totalorder %s91, %s107
      %p109 = scmp.eq.s32.totalorder %s20, 0
      %p110 = por %p108, %p109
      %p111 = scmp.le.s32.totalorder 1, %s14
      %p112 = scmp.lt.s32.totalorder %s14, 5
      %p113 = pnand %p111, %p112
      %p114 = pneg %p113
      // Predicated region
      $region9: #{tpu_custom_call.1} parent=5 // pred_check
        _
      $region10: #{tpu_custom_call.1} parent=5 // pred_check_branch
        %116 = sbr.rel (%p113) target = $region12
      $region11: #{tpu_custom_call.1} parent=5 // pred_region
        %s117 = ssub.s32 %s14, 1
        // Predicated region
        $region13: #{tpu_custom_call.1} parent=11 // pred_check
          %p118 = pneg %p75
        $region14: #{tpu_custom_call.1} parent=11 // pred_check_branch
          %120 = sbr.rel (%p118) target = $region16
        $region15: #{tpu_custom_call.1} parent=11 // pred_region
          _
        $region16: #{tpu_custom_call.1} parent=11 // pred_fallthru
          _
      $region12: #{tpu_custom_call.1} parent=5 // pred_fallthru
        _
      %p121 = scmp.lt.s32.totalorder %s14, 4
      // Predicated region
      $region17: #{tpu_custom_call.1} parent=5 // pred_check
        %p122 = pneg %p121
      $region18: #{tpu_custom_call.1} parent=5 // pred_check_branch
        %124 = sbr.rel (%p122) target = $region20
      $region19: #{tpu_custom_call.1} parent=5 // pred_region
        // Predicated region
        $region21: #{tpu_custom_call.1} parent=19 // pred_check
          %p125 = pneg %p48
        $region22: #{tpu_custom_call.1} parent=19 // pred_check_branch
          %127 = sbr.rel (%p125) target = $region24
        $region23: #{tpu_custom_call.1} parent=19 // pred_region
          %s128 = sand.u32 %s38, 1
          %s129 = scalar_lea.sflag [#allocation3], %s128
          %s130 = sand.u32 %s38, 1
          %s131 = smul.addr %s130, 4
          %s132 = scalar_lea.vmem [#allocation2], %s131
          %s134 = ssub.s32 64, 64
          %135 = vsyncadd %s129, %s134
          %s136 = smul.addr %s21, 2
          %s137 = sadd.s32 %s22, %s136
          %s138 = smul.addr %s137, 64
          %s139 = scalar_lea.hbm %s0, %s138
          %s141 = sshll.u32 %s132, 4
          %s142 = int_to_ptr.vmem [resolvable:$true] %s141
          %144 = dma.hbm_to_vmem [thread:$0]  %s139, 64, %s142, %s129
        $region24: #{tpu_custom_call.1} parent=19 // pred_fallthru
          _
      $region20: #{tpu_custom_call.1} parent=5 // pred_fallthru
        _
      %p145 = scmp.le.s32.totalorder 1, %s14
      %p146 = scmp.lt.s32.totalorder %s14, 5
      %p147 = pnand %p145, %p146
      %p148 = pneg %p147
      // Predicated region
      $region25: #{tpu_custom_call.1} parent=5 // pred_check
        _
      $region26: #{tpu_custom_call.1} parent=5 // pred_check_branch
        %150 = sbr.rel (%p147) target = $region28
      $region27: #{tpu_custom_call.1} parent=5 // pred_region
        %s151 = ssub.s32 %s14, 1
        %s152 = sand.u32 %s41, 1
        %s153 = scalar_lea.sflag [#allocation3], %s152
        %s154 = sand.u32 %s41, 1
        %s155 = smul.addr %s154, 4
        %s156 = scalar_lea.vmem [#allocation2], %s155
        // Predicated region
        $region29: #{tpu_custom_call.1} parent=27 // pred_check
          %p157 = pneg %p54
        $region30: #{tpu_custom_call.1} parent=27 // pred_check_branch
          %159 = sbr.rel (%p157) target = $region32
        $region31: #{tpu_custom_call.1} parent=27 // pred_region
          %160 = dma.done %s153, 64
        $region32: #{tpu_custom_call.1} parent=27 // pred_fallthru
          _
        %s161 = sand.u32 %s41, 1
        %s162 = scalar_lea.sflag [#allocation3], %s161
        %s163 = sand.u32 %s41, 1
        %s164 = smul.addr %s163, 4
        %s165 = scalar_lea.vmem [#allocation2], %s164
        %p166 = pneg %p54
        %p167 = pneg %p51
        %p168 = pneg %p75
        %p169 = pneg %p72
        %p170 = pneg %p103
        %p171 = pneg %p100
        %s172 = sand.u32 %s90, 1
        %s173 = scalar_lea.sflag [#allocation4], %s172
        %s174 = sand.u32 %s90, 1
        %s175 = smul.addr %s174, 4
        %s176 = scalar_lea.vmem [#allocation5], %s175
        %v177 = vld [vmem:[%s156] sm:$0xf]
        %v178 = vmul.f32 %v177, %v177
        %vm179 = vcmask 1043456
        %v180 = vsel %vm179, %v178, 0.0
        %v181 = vrot.slane %v180, 4
        %v182 = vadd.f32 %v180, %v181
        %v183 = vrot.slane %v182, 2
        %v184 = vadd.f32 %v182, %v183
        %v185 = vrot.slane %v184, 1
        %v186 = vadd.f32 %v184, %v185
        %v187 = vmax.f32 %v186, 1e-24
        %v188 = vrsqrt.pop %v187
        %v189 = vmul.f32 %v177, %v188
        %v190 = vld [vmem:[%s1] sm:$0xf]
        %192 = vset.pattern.permute.xlu0 0
        %193 = vperm.xlu0 %192, %v190
        %v194 = vpop.permute.xlu0 %193
        %v196 = vmul.f32 %v189, %v194
        %197 = vst [vmem:[%s176] sm:$0xf] %v196
        %s198 = sand.u32 %s90, 1
        %s199 = scalar_lea.sflag [#allocation4], %s198
        %s200 = sand.u32 %s90, 1
        %s201 = smul.addr %s200, 4
        %s202 = scalar_lea.vmem [#allocation5], %s201
        // Predicated region
        $region33: #{tpu_custom_call.1} parent=27 // pred_check
          %p203 = pneg %p100
        $region34: #{tpu_custom_call.1} parent=27 // pred_check_branch
          %205 = sbr.rel (%p203) target = $region36
        $region35: #{tpu_custom_call.1} parent=27 // pred_region
          %s207 = ssub.s32 64, 64
          %208 = vsyncadd %s199, %s207
          %s209 = smul.addr %s23, 2
          %s210 = sadd.s32 %s24, %s209
          %s211 = smul.addr %s210, 64
          %s212 = scalar_lea.hbm %s2, %s211
          %s214 = sshll.u32 %s202, 4
          %s215 = int_to_ptr.vmem [resolvable:$true] %s214
          %217 = dma.vmem_to_hbm [thread:$0]  %s215, 64, %s212, %s199
        $region36: #{tpu_custom_call.1} parent=27 // pred_fallthru
          _
      $region28: #{tpu_custom_call.1} parent=5 // pred_fallthru
        _
      %p218 = scmp.le.s32.totalorder 2, %s14
      // Predicated region
      $region37: #{tpu_custom_call.1} parent=5 // pred_check
        %p219 = pneg %p218
      $region38: #{tpu_custom_call.1} parent=5 // pred_check_branch
        %221 = sbr.rel (%p219) target = $region40
      $region39: #{tpu_custom_call.1} parent=5 // pred_region
        %s222 = ssub.s32 %s14, 2
        // Predicated region
        $region41: #{tpu_custom_call.1} parent=39 // pred_check
          %p223 = pneg %p106
        $region42: #{tpu_custom_call.1} parent=39 // pred_check_branch
          %225 = sbr.rel (%p223) target = $region44
        $region43: #{tpu_custom_call.1} parent=39 // pred_region
          %s226 = sand.u32 %s91, 1
          %s227 = scalar_lea.sflag [#allocation4], %s226
          %s228 = sand.u32 %s91, 1
          %s229 = smul.addr %s228, 4
          %s230 = scalar_lea.vmem [#allocation5], %s229
          %231 = dma.done %s227, 64
        $region44: #{tpu_custom_call.1} parent=39 // pred_fallthru
          _
      $region40: #{tpu_custom_call.1} parent=5 // pred_fallthru
        _
    $region6: #{tpu_custom_call.1} parent=1 // loop_footer
      %s18 = sadd.s32 1, %s14
    $region7: #{tpu_custom_call.1} parent=1 // loop_footer_branch
      %13 = sbr.rel target = $region3
    $region8: #{tpu_custom_call.1} parent=1 // loop_exit
      _
    %232 = vsyncpa [#allocation3], 1
    %s233 = scalar_lea.sflag [#allocation3], 1
    %234 = vsyncpa %s233, 1
    %235 = vsyncpa [#allocation4], 1
    %s236 = scalar_lea.sflag [#allocation4], 1
    %237 = vsyncpa %s236, 1

</llo_original>
